<compile_context>
chip_gen: v6e
topology: v6e:2x2x1
jax: 0.10.0
libtpu: 0.0.40
codegen_flags: <defaults>
</compile_context>

<pallas_src>
import jax
import jax.numpy as jnp
from jax.experimental import pallas as pl
from jax.experimental.pallas import tpu as pltpu

EPS = 1e-6


def _sublayer_connection_kernel(x_ref, a2_ref, b2_ref, w_ref, bias_ref, o_ref,
                                normed_ref):
    k = pl.program_id(1)
    tk = w_ref.shape[0]

    @pl.when(k == 0)
    def _():
        # LayerNorm with the module's exact semantics: unbiased std (ddof=1),
        # (x - mean) / (std + eps), all in f32.
        x = x_ref[...]                                     # (TM, D) f32
        d = x.shape[-1]
        mean = jnp.mean(x, axis=-1, keepdims=True)
        diff = x - mean
        var = jnp.sum(diff * diff, axis=-1, keepdims=True) * (1.0 / (d - 1))
        rstd = 1.0 / (jnp.sqrt(var) + EPS)                 # exact divide (mem-bound kernel)
        normed = (diff * rstd) * a2_ref[...] + b2_ref[...]
        normed_ref[...] = normed.astype(jnp.bfloat16)      # MXU operand dtype
        # Fold residual + bias into the accumulator init; the output block is
        # resident across the inner k axis (index map constant in k).
        o_ref[...] = x + bias_ref[...]

    # Sublayer Linear(D, D), K-tiled: bf16 operands into the MXU, f32 accumulation
    # directly into the resident f32 output block.
    if tk % 128 == 0:
        k_start = pl.multiple_of(k * tk, 128)
    else:                                                  # tk == D (single k step)
        k_start = k * tk
    n_slab = normed_ref[:, pl.ds(k_start, tk)]
    o_ref[...] += jnp.dot(n_slab, w_ref[...], preferred_element_type=jnp.float32)


def _round_up(n, m):
    return ((n + m - 1) // m) * m


def _vmem_capacity_bytes():
    """Per-TensorCore VMEM capacity; conservative v7x default if unqueryable."""
    try:
        cap = getattr(pltpu.get_tpu_info(), "vmem_capacity_bytes", None)
        if cap:
            return int(cap)
    except Exception:
        pass
    return 64 * 1024 * 1024


def sublayer_connection(x, a2, b2, w, bias):
    """x: (B, S, D) f32; a2, b2, bias: (1, D) f32; w: (D, D), bf16 preferred.

    Returns (B, S, D) f32 = x + (LayerNorm(x) @ w + bias).
    """
    B, S, D = x.shape
    M = B * S
    x2 = x.reshape(M, D)

    # bf16 weight for MXU / HBM traffic. Pass w already in bf16 to avoid a
    # per-call casting pass over the weight in HBM.
    w_bf16 = w if w.dtype == jnp.bfloat16 else w.astype(jnp.bfloat16)

    # ---- generation-aware VMEM budget ---------------------------------------
    cap = _vmem_capacity_bytes()
    vmem_limit = (cap * 13) // 16          # ~104 MiB on 128 MiB v5e/v6e, ~52 MiB on v7x

    # ---- K tile (weight input-dim slab) -------------------------------------
    tk = D
    if D > 1024:
        for cand in (1024, 512, 256, 128):
            if D % cand == 0:
                tk = cand
                break
    # TODO(synk): very large D with no multiple-of-128 divisor keeps a full-D
    #             weight block and may still exceed VMEM.
    kt = D // tk

    # ---- row tile, sized from the VMEM budget --------------------------------
    fixed = 2 * tk * D * 2                 # double-buffered bf16 weight slab
    fixed += 3 * 2 * D * 4                 # double-buffered a_2 / b_2 / bias
    fixed += 2 * 1024 * 1024               # compiler scratch / headroom
    per_row = 2 * D * 4                    # double-buffered f32 input rows
    per_row += 2 * D * 4                   # double-buffered f32 output rows
    per_row += D * 2                       # bf16 normed scratch
    per_row += 4 * D * 4                   # live f32 temporaries in the body
    tm = (vmem_limit - fixed) // per_row
    tm = int(max(8, min(1024, (tm // 8) * 8)))
    if M <= tm:
        # Split small problems into >=2 row tiles so the "parallel" axis feeds
        # both v7x TensorCores (no effect on single-TC v5e/v6e).
        tm = max(8, _round_up(-(-M // 2), 8))

    grid = (pl.cdiv(M, tm), kt)            # partial last row block: OOB writes dropped

    out = pl.pallas_call(
        _sublayer_connection_kernel,
        out_shape=jax.ShapeDtypeStruct((M, D), jnp.float32),
        grid_spec=pltpu.PrefetchScalarGridSpec(
            num_scalar_prefetch=0,
            grid=grid,
            in_specs=[
                pl.BlockSpec((tm, D), lambda i, k: (i, 0)),   # x rows (constant in k)
                pl.BlockSpec((1, D), lambda i, k: (0, 0)),    # a_2
                pl.BlockSpec((1, D), lambda i, k: (0, 0)),    # b_2
                pl.BlockSpec((tk, D), lambda i, k: (k, 0)),   # W k-slab (bf16)
                pl.BlockSpec((1, D), lambda i, k: (0, 0)),    # bias
            ],
            out_specs=pl.BlockSpec((tm, D), lambda i, k: (i, 0)),
            scratch_shapes=[pltpu.VMEM((tm, D), jnp.bfloat16)],   # normed(x)
        ),
        compiler_params=pltpu.CompilerParams(
            dimension_semantics=("parallel", "arbitrary"),
            vmem_limit_bytes=int(vmem_limit),
        ),
    )(x2, a2, b2, w_bf16, bias)

    return out.reshape(B, S, D)


def reference(x, a2, b2, w, bias):
    """Pure-f32 reference with the module's exact semantics."""
    d = x.shape[-1]
    mean = jnp.mean(x, axis=-1, keepdims=True)
    diff = x - mean
    var = jnp.sum(diff * diff, axis=-1, keepdims=True) / (d - 1)
    std = jnp.sqrt(var)
    normed = a2[0] * diff / (std + EPS) + b2[0]
    return x + jnp.einsum("bsd,de->bse", normed, w) + bias[0]


if __name__ == "__main__":
    B, S, D = 2, 8, 128

    key = jax.random.PRNGKey(0)
    kx, kw, kb = jax.random.split(key, 3)

    x = jax.random.normal(kx, (B, S, D), dtype=jnp.float32)

    # LayerNorm params exactly as the module init: ones / zeros.
    a2 = jnp.ones((1, D), dtype=jnp.float32)
    b2 = jnp.zeros((1, D), dtype=jnp.float32)

    # Deterministic sublayer (Linear(D, D)) parameters.
    w = jax.random.normal(kw, (D, D), dtype=jnp.float32) * (1.0 / D ** 0.5)
    bias = jax.random.normal(kb, (1, D), dtype=jnp.float32) * 0.01

    # Cast the weight to bf16 once, outside the per-call path (hoisted cast).
    w_bf16 = w.astype(jnp.bfloat16)

    out = sublayer_connection(x, a2, b2, w_bf16, bias)
    out = jax.block_until_ready(out)

    ref = reference(x, a2, b2, w, bias)
    # Tolerance covers bf16 MXU operands vs the f32 reference weight; the
    # LayerNorm divide is now exact (no approx reciprocal error).
    assert out.shape == ref.shape, "shape mismatch vs reference"
    assert jnp.allclose(out, ref, atol=2.5e-2, rtol=2.5e-2), "mismatch vs reference"

    print("KERNEL_OK")
</pallas_src>

<mosaic_0001>
module attributes {stable_mosaic.version = 11 : i64} {
  func.func @_sublayer_connection_kernel(%arg0: i32, %arg1: i32, %arg2: memref<8x128xf32, #tpu.memory_space<vmem>>, %arg3: memref<1x128xf32, #tpu.memory_space<vmem>>, %arg4: memref<1x128xf32, #tpu.memory_space<vmem>>, %arg5: memref<128x128xbf16, #tpu.memory_space<vmem>>, %arg6: memref<1x128xf32, #tpu.memory_space<vmem>>, %arg7: memref<8x128xf32, #tpu.memory_space<vmem>>, %arg8: memref<8x128xbf16, #tpu.memory_space<vmem>>) attributes {dimension_semantics = [#tpu.dimension_semantics<parallel>, #tpu.dimension_semantics<arbitrary>], iteration_bounds = array<i64: 2, 1>, scalar_prefetch = 0 : i64, scratch_operands = 1 : i64, tpu.core_type = #tpu.core_type<tc>, window_params = [{transform_indices = @transform_0, window_bounds = array<i64: 8, 128>}, {pipeline_mode = #tpu.pipeline_mode<synchronous>, transform_indices = @transform_1, window_bounds = array<i64: 1, 128>}, {pipeline_mode = #tpu.pipeline_mode<synchronous>, transform_indices = @transform_2, window_bounds = array<i64: 1, 128>}, {transform_indices = @transform_3, window_bounds = array<i64: 128, 128>}, {pipeline_mode = #tpu.pipeline_mode<synchronous>, transform_indices = @transform_4, window_bounds = array<i64: 1, 128>}, {transform_indices = @transform_5, window_bounds = array<i64: 8, 128>}]} {
    %c0_i32 = arith.constant 0 : i32
    %0 = arith.cmpi eq, %arg1, %c0_i32 : i32
    %1 = arith.extui %0 : i1 to i32
    %c0_i32_0 = arith.constant 0 : i32
    %2 = arith.cmpi ne, %1, %c0_i32_0 : i32
    scf.if %2 {
      %c0_7 = arith.constant 0 : index
      %c0_8 = arith.constant 0 : index
      %12 = vector.load %arg2[%c0_7, %c0_8] : memref<8x128xf32, #tpu.memory_space<vmem>>, vector<8x128xf32>
      %cst_9 = arith.constant dense<0.000000e+00> : vector<8xf32>
      %13 = vector.multi_reduction <add>, %12, %cst_9 [1] : vector<8x128xf32> to vector<8xf32>
      %14 = vector.shape_cast %13 : vector<8xf32> to vector<8x1xf32>
      %cst_10 = arith.constant 1.280000e+02 : f32
      %15 = vector.broadcast %cst_10 : f32 to vector<8x1xf32>
      %16 = arith.divf %14, %15 : vector<8x1xf32>
      %17 = vector.broadcast %16 : vector<8x1xf32> to vector<8x128xf32>
      %18 = arith.subf %12, %17 : vector<8x128xf32>
      %19 = arith.mulf %18, %18 : vector<8x128xf32>
      %cst_11 = arith.constant dense<0.000000e+00> : vector<8xf32>
      %20 = vector.multi_reduction <add>, %19, %cst_11 [1] : vector<8x128xf32> to vector<8xf32>
      %21 = vector.shape_cast %20 : vector<8xf32> to vector<8x1xf32>
      %cst_12 = arith.constant 0.00787401571 : f32
      %22 = vector.broadcast %cst_12 : f32 to vector<8x1xf32>
      %23 = arith.mulf %21, %22 : vector<8x1xf32>
      %24 = math.sqrt %23 : vector<8x1xf32>
      %cst_13 = arith.constant 9.99999997E-7 : f32
      %25 = vector.broadcast %cst_13 : f32 to vector<8x1xf32>
      %26 = arith.addf %24, %25 : vector<8x1xf32>
      %cst_14 = arith.constant 1.000000e+00 : f32
      %27 = vector.broadcast %cst_14 : f32 to vector<8x1xf32>
      %28 = arith.divf %27, %26 : vector<8x1xf32>
      %29 = vector.broadcast %28 : vector<8x1xf32> to vector<8x128xf32>
      %30 = arith.mulf %18, %29 : vector<8x128xf32>
      %c0_15 = arith.constant 0 : index
      %c0_16 = arith.constant 0 : index
      %31 = vector.load %arg3[%c0_15, %c0_16] : memref<1x128xf32, #tpu.memory_space<vmem>>, vector<1x128xf32>
      %32 = vector.broadcast %31 : vector<1x128xf32> to vector<8x128xf32>
      %33 = arith.mulf %30, %32 : vector<8x128xf32>
      %c0_17 = arith.constant 0 : index
      %c0_18 = arith.constant 0 : index
      %34 = vector.load %arg4[%c0_17, %c0_18] : memref<1x128xf32, #tpu.memory_space<vmem>>, vector<1x128xf32>
      %35 = vector.broadcast %34 : vector<1x128xf32> to vector<8x128xf32>
      %36 = arith.addf %33, %35 : vector<8x128xf32>
      %37 = arith.truncf %36 : vector<8x128xf32> to vector<8x128xbf16>
      %c0_19 = arith.constant 0 : index
      %c0_20 = arith.constant 0 : index
      %38 = vector.load %arg8[%c0_19, %c0_20] : memref<8x128xbf16, #tpu.memory_space<vmem>>, vector<8x128xbf16>
      tpu.vector_store %arg8[%c0_19, %c0_20], %37 {strides = array<i32>} : memref<8x128xbf16, #tpu.memory_space<vmem>>, vector<8x128xbf16>,
      %c0_21 = arith.constant 0 : index
      %c0_22 = arith.constant 0 : index
      %39 = vector.load %arg6[%c0_21, %c0_22] : memref<1x128xf32, #tpu.memory_space<vmem>>, vector<1x128xf32>
      %40 = vector.broadcast %39 : vector<1x128xf32> to vector<8x128xf32>
      %41 = arith.addf %12, %40 : vector<8x128xf32>
      %c0_23 = arith.constant 0 : index
      %c0_24 = arith.constant 0 : index
      %42 = vector.load %arg7[%c0_23, %c0_24] : memref<8x128xf32, #tpu.memory_space<vmem>>, vector<8x128xf32>
      tpu.vector_store %arg7[%c0_23, %c0_24], %41 {strides = array<i32>} : memref<8x128xf32, #tpu.memory_space<vmem>>, vector<8x128xf32>,
    } else {
    }
    %c128_i32 = arith.constant 128 : i32
    %3 = arith.muli %arg1, %c128_i32 : i32
    %4 = tpu.assume_multiple %3, 128 : i32
    %c0 = arith.constant 0 : index
    %5 = arith.index_cast %4 : i32 to index
    %6 = vector.load %arg8[%c0, %5] : memref<8x128xbf16, #tpu.memory_space<vmem>>, vector<8x128xbf16>
    %c0_1 = arith.constant 0 : index
    %c0_2 = arith.constant 0 : index
    %7 = vector.load %arg7[%c0_1, %c0_2] : memref<8x128xf32, #tpu.memory_space<vmem>>, vector<8x128xf32>
    %c0_3 = arith.constant 0 : index
    %c0_4 = arith.constant 0 : index
    %8 = vector.load %arg5[%c0_3, %c0_4] : memref<128x128xbf16, #tpu.memory_space<vmem>>, vector<128x128xbf16>
    %cst = arith.constant dense<0.000000e+00> : vector<8x128xf32>
    %9 = tpu.matmul %6, %8, %cst {dimension_numbers = #tpu.dot_dimension_numbers<[1], [0], [0], [1], [0, 0, 1, 1], [], []>} : vector<8x128xbf16>, vector<128x128xbf16>, vector<8x128xf32> -> vector<8x128xf32>
    %10 = arith.addf %7, %9 : vector<8x128xf32>
    %c0_5 = arith.constant 0 : index
    %c0_6 = arith.constant 0 : index
    %11 = vector.load %arg7[%c0_5, %c0_6] : memref<8x128xf32, #tpu.memory_space<vmem>>, vector<8x128xf32>
    tpu.vector_store %arg7[%c0_5, %c0_6], %10 {strides = array<i32>} : memref<8x128xf32, #tpu.memory_space<vmem>>, vector<8x128xf32>,
    return
  }
  func.func @transform_0(%arg0: i32, %arg1: i32) -> (i32, i32) {
    %c0_i32 = arith.constant 0 : i32
    %c0_i32_0 = arith.constant 0 : i32
    return %arg0, %c0_i32 : i32, i32
  }
  func.func @transform_1(%arg0: i32, %arg1: i32) -> (i32, i32) {
    %c0_i32 = arith.constant 0 : i32
    %c0_i32_0 = arith.constant 0 : i32
    %c0_i32_1 = arith.constant 0 : i32
    return %c0_i32, %c0_i32_0 : i32, i32
  }
  func.func @transform_2(%arg0: i32, %arg1: i32) -> (i32, i32) {
    %c0_i32 = arith.constant 0 : i32
    %c0_i32_0 = arith.constant 0 : i32
    %c0_i32_1 = arith.constant 0 : i32
    return %c0_i32, %c0_i32_0 : i32, i32
  }
  func.func @transform_3(%arg0: i32, %arg1: i32) -> (i32, i32) {
    %c0_i32 = arith.constant 0 : i32
    %c0_i32_0 = arith.constant 0 : i32
    return %arg1, %c0_i32 : i32, i32
  }
  func.func @transform_4(%arg0: i32, %arg1: i32) -> (i32, i32) {
    %c0_i32 = arith.constant 0 : i32
    %c0_i32_0 = arith.constant 0 : i32
    %c0_i32_1 = arith.constant 0 : i32
    return %c0_i32, %c0_i32_0 : i32, i32
  }
  func.func @transform_5(%arg0: i32, %arg1: i32) -> (i32, i32) {
    %c0_i32 = arith.constant 0 : i32
    %c0_i32_0 = arith.constant 0 : i32
    return %arg0, %c0_i32 : i32, i32
  }
}

</mosaic_0001>

<llo_original>
// kernel: tpu_custom_call.1
$region0: #{tpu_custom_call.1}
  #allocation0 [shape = 'u32[]', space=smem, size = 0x4, offset = 0x4, fixed_abs, tag = 'smem constant byte address 0x4 - core index']
  #allocation1 [shape = 'u32[144,128]{1,0:T(1,128)}', space=vmem, size = 0x12000, scoped, tag = 'internal scratch']
  #allocation2 [shape = 'bf16[8,128]{1,0:T(8,128)(2,1)}', space=vmem, size = 0x800, scoped, tag = 'scratch operand']
  %s0 = inlined_call_operand.hbm [shape: f32[16,128], index: 0, kind: input, shape index: {}]
  %s1 = inlined_call_operand.vmem [shape: f32[1,128], index: 1, kind: input, shape index: {}]
  %s2 = inlined_call_operand.vmem [shape: f32[1,128], index: 2, kind: input, shape index: {}]
  %s3 = inlined_call_operand.hbm [shape: bf16[128,128], index: 3, kind: input, shape index: {}]
  %s4 = inlined_call_operand.vmem [shape: f32[1,128], index: 4, kind: input, shape index: {}]
  %s5 = inlined_call_operand.hbm [shape: f32[16,128], index: 5, kind: output, shape index: {}]
  %s6 = sld [smem:[#allocation0]]
  $region65: #{tpu_custom_call.1} parent=0
    _
  %s8 = ssub.s32 1, %s6
  %s9 = scalar_select 0, %s8, %s6
  $region1: #{tpu_custom_call.1} parent=0
    #allocation3 [shape = 'u8[8192]{0}', space=vmem, size = 0x2000, scoped, tag = 'input window, operand 0']
    #allocation4 [shape = 's32[2]{0}', space=sflag, size = 0x8, scoped, tag = 'scoped memory for tpu_custom_call.1']
    #allocation5 [shape = 's32[2]{0}', space=sflag, size = 0x8, scoped, tag = 'scoped memory for tpu_custom_call.1']
    #allocation6 [shape = 'u8[32768]{0}', space=vmem, size = 0x8000, scoped, tag = 'input window, operand 3, single buffered']
    #allocation7 [shape = 's32[1]{0}', space=sflag, size = 0x4, scoped, tag = 'scoped memory for tpu_custom_call.1']
    #allocation8 [shape = 'u8[8192]{0}', space=vmem, size = 0x2000, scoped, tag = 'output window, operand 0']
    %10 = vsyncpa [#allocation4], 0
    %s11 = scalar_lea.sflag [#allocation4], 1
    %12 = vsyncpa %s11, 0
    %13 = vsyncpa [#allocation7], 0
    %14 = vsyncpa [#allocation5], 0
    %s15 = scalar_lea.sflag [#allocation5], 1
    %16 = vsyncpa %s15, 0
    loop: start=0, step=1, limit=4
    $region2: #{tpu_custom_call.1} parent=1 // loop_pre_header
      _
    $region3: #{tpu_custom_call.1} parent=1 // loop_header
      %s18 = sphi 0, %s22
      %p19 = scmp.ge.s32.totalorder %s18, 4
      %s25 = sphi 0, %s37
      %s26 = sphi 0, %s33
      %s27 = sphi 0, %s25
      %s28 = sphi 0, %s26
      %s29 = sphi 0, %s27
      %s30 = sphi 0, %s28
      %s40 = sphi 0, %s42
      %s43 = sphi 0, %s40
      %s44 = sphi 0, %s43
      %s60 = sphi 0, %s44
      %s64 = sphi 0, %s64
      %s66 = sphi 0, %s64
      %s67 = sphi 0, %s66
      %s81 = sphi 0, %s67
      %s85 = sphi 0, %s85
      %s87 = sphi 0, %s85
      %s88 = sphi 0, %s87
      %s102 = sphi 0, %s88
      %s108 = sphi 0, %s110
      %s111 = sphi 0, %s108
      %s112 = sphi 0, %s111
      %s128 = sphi 0, %s112
      %s132 = sphi 0, %s132
      %s134 = sphi 0, %s132
      %s135 = sphi 0, %s134
      %s149 = sphi 0, %s135
      %s155 = sphi 0, %s157
      %s158 = sphi 0, %s155
      %s159 = sphi 0, %s158
      %s175 = sphi 0, %s159
    $region4: #{tpu_custom_call.1} parent=1 // loop_header_branch
      %21 = sbr.rel (%p19) target = $region8
    $region5: #{tpu_custom_call.1} parent=1 // loop_body
      %s23 = ssub.s32 %s18, 1
      %s24 = ssub.s32 %s18, 2
      %s31 = sadd.s32 1, %s26
      %p32 = scmp.ge.s32.totalorder %s31, 1
      %s33 = scalar_select %p32, 0, %s31
      %s34 = sadd.s32 1, %s25
      %s35 = scalar_select %p32, %s34, %s25
      %p36 = scmp.ge.s32.totalorder %s35, 2
      %s37 = scalar_select %p36, 0, %s35
      %s38 = ssub.s32 %s25, %s37
      %p39 = scmp.eq.s32.totalorder %s38, 0
      %s41 = sadd.s32 %s40, 1
      %s42 = scalar_select %p39, %s40, %s41
      %p45 = pneg %p39
      %p46 = scmp.eq.s32.totalorder %s18, 1
      %p47 = por %p45, %p46
      %p48 = scmp.ne.s32.totalorder %s40, %s43
      %p49 = scmp.eq.s32.totalorder %s18, 0
      %p50 = por %p48, %p49
      %p51 = scmp.ne.s32.totalorder %s40, %s43
      %p52 = scmp.eq.s32.totalorder %s23, 1
      %p53 = por %p51, %p52
      %p54 = scmp.ne.s32.totalorder %s43, %s44
      %p55 = scmp.eq.s32.totalorder %s23, 0
      %p56 = por %p54, %p55
      %p57 = scmp.ne.s32.totalorder %s43, %s44
      %p58 = scmp.eq.s32.totalorder %s24, 1
      %p59 = por %p57, %p58
      %p61 = scmp.ne.s32.totalorder %s44, %s60
      %p62 = scmp.eq.s32.totalorder %s24, 0
      %p63 = por %p61, %p62
      %s65 = sadd.s32 %s64, 1
      %p68 = scmp.eq.s32.totalorder %s18, 1
      %p69 = scmp.ne.s32.totalorder %s64, %s66
      %p70 = scmp.eq.s32.totalorder %s18, 0
      %p71 = por %p69, %p70
      %p72 = scmp.ne.s32.totalorder %s64, %s66
      %p73 = scmp.eq.s32.totalorder %s23, 1
      %p74 = por %p72, %p73
      %p75 = scmp.ne.s32.totalorder %s66, %s67
      %p76 = scmp.eq.s32.totalorder %s23, 0
      %p77 = por %p75, %p76
      %p78 = scmp.ne.s32.totalorder %s66, %s67
      %p79 = scmp.eq.s32.totalorder %s24, 1
      %p80 = por %p78, %p79
      %p82 = scmp.ne.s32.totalorder %s67, %s81
      %p83 = scmp.eq.s32.totalorder %s24, 0
      %p84 = por %p82, %p83
      %s86 = sadd.s32 %s85, 1
      %p89 = scmp.eq.s32.totalorder %s18, 1
      %p90 = scmp.ne.s32.totalorder %s85, %s87
      %p91 = scmp.eq.s32.totalorder %s18, 0
      %p92 = por %p90, %p91
      %p93 = scmp.ne.s32.totalorder %s85, %s87
      %p94 = scmp.eq.s32.totalorder %s23, 1
      %p95 = por %p93, %p94
      %p96 = scmp.ne.s32.totalorder %s87, %s88
      %p97 = scmp.eq.s32.totalorder %s23, 0
      %p98 = por %p96, %p97
      %p99 = scmp.ne.s32.totalorder %s87, %s88
      %p100 = scmp.eq.s32.totalorder %s24, 1
      %p101 = por %p99, %p100
      %p103 = scmp.ne.s32.totalorder %s88, %s102
      %p104 = scmp.eq.s32.totalorder %s24, 0
      %p105 = por %p103, %p104
      %s106 = ssub.s32 %s26, %s33
      %p107 = scmp.eq.s32.totalorder %s106, 0
      %s109 = sadd.s32 %s108, 1
      %s110 = scalar_select %p107, %s108, %s109
      %p113 = pneg %p107
      %p114 = scmp.eq.s32.totalorder %s18, 1
      %p115 = por %p113, %p114
      %p116 = scmp.ne.s32.totalorder %s108, %s111
      %p117 = scmp.eq.s32.totalorder %s18, 0
      %p118 = por %p116, %p117
      %p119 = scmp.ne.s32.totalorder %s108, %s111
      %p120 = scmp.eq.s32.totalorder %s23, 1
      %p121 = por %p119, %p120
      %p122 = scmp.ne.s32.totalorder %s111, %s112
      %p123 = scmp.eq.s32.totalorder %s23, 0
      %p124 = por %p122, %p123
      %p125 = scmp.ne.s32.totalorder %s111, %s112
      %p126 = scmp.eq.s32.totalorder %s24, 1
      %p127 = por %p125, %p126
      %p129 = scmp.ne.s32.totalorder %s112, %s128
      %p130 = scmp.eq.s32.totalorder %s24, 0
      %p131 = por %p129, %p130
      %s133 = sadd.s32 %s132, 1
      %p136 = scmp.eq.s32.totalorder %s18, 1
      %p137 = scmp.ne.s32.totalorder %s132, %s134
      %p138 = scmp.eq.s32.totalorder %s18, 0
      %p139 = por %p137, %p138
      %p140 = scmp.ne.s32.totalorder %s132, %s134
      %p141 = scmp.eq.s32.totalorder %s23, 1
      %p142 = por %p140, %p141
      %p143 = scmp.ne.s32.totalorder %s134, %s135
      %p144 = scmp.eq.s32.totalorder %s23, 0
      %p145 = por %p143, %p144
      %p146 = scmp.ne.s32.totalorder %s134, %s135
      %p147 = scmp.eq.s32.totalorder %s24, 1
      %p148 = por %p146, %p147
      %p150 = scmp.ne.s32.totalorder %s135, %s149
      %p151 = scmp.eq.s32.totalorder %s24, 0
      %p152 = por %p150, %p151
      %s153 = ssub.s32 %s25, %s37
      %p154 = scmp.eq.s32.totalorder %s153, 0
      %s156 = sadd.s32 %s155, 1
      %s157 = scalar_select %p154, %s155, %s156
      %p160 = pneg %p154
      %p161 = scmp.eq.s32.totalorder %s18, 1
      %p162 = por %p160, %p161
      %p163 = scmp.ne.s32.totalorder %s155, %s158
      %p164 = scmp.eq.s32.totalorder %s18, 0
      %p165 = por %p163, %p164
      %p166 = scmp.ne.s32.totalorder %s155, %s158
      %p167 = scmp.eq.s32.totalorder %s23, 1
      %p168 = por %p166, %p167
      %p169 = scmp.ne.s32.totalorder %s158, %s159
      %p170 = scmp.eq.s32.totalorder %s23, 0
      %p171 = por %p169, %p170
      %p172 = scmp.ne.s32.totalorder %s158, %s159
      %p173 = scmp.eq.s32.totalorder %s24, 1
      %p174 = por %p172, %p173
      %p176 = scmp.ne.s32.totalorder %s159, %s175
      %p177 = scmp.eq.s32.totalorder %s24, 0
      %p178 = por %p176, %p177
      %p179 = scmp.le.s32.totalorder 1, %s18
      %p180 = scmp.lt.s32.totalorder %s18, 3
      %p181 = pnand %p179, %p180
      %p182 = pneg %p181
      // Predicated region
      $region9: #{tpu_custom_call.1} parent=5 // pred_check
        _
      $region10: #{tpu_custom_call.1} parent=5 // pred_check_branch
        %184 = sbr.rel (%p181) target = $region12
      $region11: #{tpu_custom_call.1} parent=5 // pred_region
        %s185 = ssub.s32 %s18, 1
        // Predicated region
        $region13: #{tpu_custom_call.1} parent=11 // pred_check
          %p186 = pneg %p77
        $region14: #{tpu_custom_call.1} parent=11 // pred_check_branch
          %188 = sbr.rel (%p186) target = $region16
        $region15: #{tpu_custom_call.1} parent=11 // pred_region
          _
        $region16: #{tpu_custom_call.1} parent=11 // pred_fallthru
          _
        // Predicated region
        $region17: #{tpu_custom_call.1} parent=11 // pred_check
          %p189 = pneg %p98
        $region18: #{tpu_custom_call.1} parent=11 // pred_check_branch
          %191 = sbr.rel (%p189) target = $region20
        $region19: #{tpu_custom_call.1} parent=11 // pred_region
          _
        $region20: #{tpu_custom_call.1} parent=11 // pred_fallthru
          _
        // Predicated region
        $region21: #{tpu_custom_call.1} parent=11 // pred_check
          %p192 = pneg %p124
        $region22: #{tpu_custom_call.1} parent=11 // pred_check_branch
          %194 = sbr.rel (%p192) target = $region24
        $region23: #{tpu_custom_call.1} parent=11 // pred_region
          %s195 = smul.u32 16, %s28
          %s197 = ssub.s32 1024, 1024
          %198 = vsyncadd [#allocation7], %s197
          %s199 = smul.addr %s195, 64
          %s200 = scalar_lea.hbm %s3, %s199
          %s201 = sshll.u32 [#allocation6], 4
          %s202 = int_to_ptr.vmem [resolvable:$true] %s201
          %207 = dma.hbm_to_vmem [thread:$0]  %s200, 1024, %s202, [#allocation7], 64, 64, 4
        $region24: #{tpu_custom_call.1} parent=11 // pred_fallthru
          _
        // Predicated region
        $region25: #{tpu_custom_call.1} parent=11 // pred_check
          %p208 = pneg %p145
        $region26: #{tpu_custom_call.1} parent=11 // pred_check_branch
          %210 = sbr.rel (%p208) target = $region28
        $region27: #{tpu_custom_call.1} parent=11 // pred_region
          _
        $region28: #{tpu_custom_call.1} parent=11 // pred_fallthru
          _
      $region12: #{tpu_custom_call.1} parent=5 // pred_fallthru
        _
      %p211 = scmp.lt.s32.totalorder %s18, 2
      // Predicated region
      $region29: #{tpu_custom_call.1} parent=5 // pred_check
        %p212 = pneg %p211
      $region30: #{tpu_custom_call.1} parent=5 // pred_check_branch
        %214 = sbr.rel (%p212) target = $region32
      $region31: #{tpu_custom_call.1} parent=5 // pred_region
        // Predicated region
        $region33: #{tpu_custom_call.1} parent=31 // pred_check
          %p215 = pneg %p50
        $region34: #{tpu_custom_call.1} parent=31 // pred_check_branch
          %217 = sbr.rel (%p215) target = $region36
        $region35: #{tpu_custom_call.1} parent=31 // pred_region
          %s218 = sand.u32 %s40, 1
          %s219 = scalar_lea.sflag [#allocation4], %s218
          %s220 = sand.u32 %s40, 1
          %s221 = smul.addr %s220, 8
          %s222 = scalar_lea.vmem [#allocation3], %s221
          %s224 = ssub.s32 128, 128
          %225 = vsyncadd %s219, %s224
          %s226 = smul.addr %s25, 128
          %s227 = scalar_lea.hbm %s0, %s226
          %s229 = sshll.u32 %s222, 4
          %s230 = int_to_ptr.vmem [resolvable:$true] %s229
          %232 = dma.hbm_to_vmem [thread:$0]  %s227, 128, %s230, %s219
        $region36: #{tpu_custom_call.1} parent=31 // pred_fallthru
          _
      $region32: #{tpu_custom_call.1} parent=5 // pred_fallthru
        _
      %p233 = scmp.le.s32.totalorder 1, %s18
      %p234 = scmp.lt.s32.totalorder %s18, 3
      %p235 = pnand %p233, %p234
      %p236 = pneg %p235
      // Predicated region
      $region37: #{tpu_custom_call.1} parent=5 // pred_check
        _
      $region38: #{tpu_custom_call.1} parent=5 // pred_check_branch
        %238 = sbr.rel (%p235) target = $region40
      $region39: #{tpu_custom_call.1} parent=5 // pred_region
        %s239 = ssub.s32 %s18, 1
        %s240 = sand.u32 %s43, 1
        %s241 = scalar_lea.sflag [#allocation4], %s240
        %s242 = sand.u32 %s43, 1
        %s243 = smul.addr %s242, 8
        %s244 = scalar_lea.vmem [#allocation3], %s243
        // Predicated region
        $region41: #{tpu_custom_call.1} parent=39 // pred_check
          %p245 = pneg %p56
        $region42: #{tpu_custom_call.1} parent=39 // pred_check_branch
          %247 = sbr.rel (%p245) target = $region44
        $region43: #{tpu_custom_call.1} parent=39 // pred_region
          %248 = dma.done %s241, 128
        $region44: #{tpu_custom_call.1} parent=39 // pred_fallthru
          _
        // Predicated region
        $region45: #{tpu_custom_call.1} parent=39 // pred_check
          %p249 = pneg %p124
        $region46: #{tpu_custom_call.1} parent=39 // pred_check_branch
          %251 = sbr.rel (%p249) target = $region48
        $region47: #{tpu_custom_call.1} parent=39 // pred_region
          %252 = dma.done [#allocation7], 1024
        $region48: #{tpu_custom_call.1} parent=39 // pred_fallthru
          _
        %s253 = sand.u32 %s43, 1
        %s254 = scalar_lea.sflag [#allocation4], %s253
        %s255 = sand.u32 %s43, 1
        %s256 = smul.addr %s255, 8
        %s257 = scalar_lea.vmem [#allocation3], %s256
        %p258 = pneg %p56
        %p259 = pneg %p53
        %p260 = pneg %p77
        %p261 = pneg %p74
        %p262 = pneg %p98
        %p263 = pneg %p95
        %p264 = pneg %p124
        %p265 = pneg %p121
        %p266 = pneg %p145
        %p267 = pneg %p142
        %p268 = pneg %p171
        %p269 = pneg %p168
        %s270 = sand.u32 %s158, 1
        %s271 = scalar_lea.sflag [#allocation5], %s270
        %s272 = sand.u32 %s158, 1
        %s273 = smul.addr %s272, 8
        %s274 = scalar_lea.vmem [#allocation8], %s273
        %s275 = smul.u32 16, %s28
        %p277 = scmp.eq.s32.totalorder %s28, 0
        // Predicated region
        $region49: #{tpu_custom_call.1} parent=39 // pred_check
          %p278 = pneg %p277
        $region50: #{tpu_custom_call.1} parent=39 // pred_check_branch
          %280 = sbr.rel (%p278) target = $region52
        $region51: #{tpu_custom_call.1} parent=39 // pred_region
          %v281 = vld [vmem:[%s244] sm:$0xff]
          %282 = vadd.xlane.f32.xlu0 %v281
          %v283 = vpop.xlane.xlu0 %282
          %v284 = vrcp.pop 128.0
          %v285 = vmul.f32 %v283, %v284
          %v286 = vsub.f32 %v281, %v285
          %v287 = vmul.f32 %v286, %v286
          %288 = vadd.xlane.f32.xlu0 %v287
          %v289 = vpop.xlane.xlu0 %288
          %v290 = vmul.f32 %v289, 0.007874016
          %v291 = vrsqrt.pop %v290
          %v292 = vmul.f32 %v290, %v291
          %vm293 = vcmp.eq.f32.partialorder %v290, inf
          %v294 = vsel %vm293, %v290, %v292
          %vm295 = vcmp.eq.f32.partialorder %v290, 0.0
          %v296 = vand.u32 %v290, 2147483648
          %v297 = vsel %vm295, %v296, %v294
          %v298 = vadd.f32 %v297, 1e-06
          %v299 = vrcp.pop %v298
          %v300 = vmul.f32 1.0, %v299
          %v301 = vmul.f32 %v286, %v300
          %v302 = vld [vmem:[%s1] sm:$0x1]
          %v304 = vlaneseq
          %v305 = vshrl.u32 %v304, 7
          %v306 = vsub.s32 0, %v305
          %v307 = vrot.slane %v302, %v306
          %v309 = vmul.f32 %v301, %v307
          %v310 = vld [vmem:[%s2] sm:$0x1]
          %v312 = vlaneseq
          %v313 = vshrl.u32 %v312, 7
          %v314 = vsub.s32 0, %v313
          %v315 = vrot.slane %v310, %v314
          %v317 = vadd.f32 %v309, %v315
          %v318 = vpack.c.bf16 %v317, %v317
          %319 = vst [vmem:[#allocation2] sm:$0xf] %v318
          %v320 = vld [vmem:[%s4] sm:$0x1]
          %v322 = vlaneseq
          %v323 = vshrl.u32 %v322, 7
          %v324 = vsub.s32 0, %v323
          %v325 = vrot.slane %v320, %v324
          %v327 = vadd.f32 %v281, %v325
          %328 = vst [vmem:[%s274] sm:$0xff] %v327
        $region52: #{tpu_custom_call.1} parent=39 // pred_fallthru
          _
        %s329 = smul.u32 %s28, 128
        %s330 = sshra.s32 %s329, 7
        %s331 = sand.u32 %s329, 127
        %s332 = smul.addr %s330, 4
        %s333 = scalar_lea.vmem [#allocation2], %s332
        %v334 = vld [vmem:[%s333] sm:$0xf]
        %v335 = vld [vmem:[%s274] sm:$0xff]
        %v336 = vld [vmem:[#allocation6] sm:$0xf]
        %v337 = vld [vmem:[#allocation6 + $0x4] sm:$0xf]
        %v338 = vld [vmem:[#allocation6 + $0x8] sm:$0xf]
        %v339 = vld [vmem:[#allocation6 + $0xc] sm:$0xf]
        %v340 = vld [vmem:[#allocation6 + $0x10] sm:$0xf]
        %v341 = vld [vmem:[#allocation6 + $0x14] sm:$0xf]
        %v342 = vld [vmem:[#allocation6 + $0x18] sm:$0xf]
        %v343 = vld [vmem:[#allocation6 + $0x1c] sm:$0xf]
        %v344 = vld [vmem:[#allocation6 + $0x20] sm:$0xf]
        %v345 = vld [vmem:[#allocation6 + $0x24] sm:$0xf]
        %v346 = vld [vmem:[#allocation6 + $0x28] sm:$0xf]
        %v347 = vld [vmem:[#allocation6 + $0x2c] sm:$0xf]
        %v348 = vld [vmem:[#allocation6 + $0x30] sm:$0xf]
        %v349 = vld [vmem:[#allocation6 + $0x34] sm:$0xf]
        %v350 = vld [vmem:[#allocation6 + $0x38] sm:$0xf]
        %v351 = vld [vmem:[#allocation6 + $0x3c] sm:$0xf]
        %v368 = vunpack.c.l.b16 %v336
        %v369 = vunpack.c.l.b16 %v337
        %v370 = vunpack.c.l.b16 %v338
        %v371 = vunpack.c.l.b16 %v339
        %v372 = vunpack.c.l.b16 %v340
        %v373 = vunpack.c.l.b16 %v341
        %v374 = vunpack.c.l.b16 %v342
        %v375 = vunpack.c.l.b16 %v343
        %v376 = vunpack.c.l.b16 %v344
        %v377 = vunpack.c.l.b16 %v345
        %v378 = vunpack.c.l.b16 %v346
        %v379 = vunpack.c.l.b16 %v347
        %v380 = vunpack.c.l.b16 %v348
        %v381 = vunpack.c.l.b16 %v349
        %v382 = vunpack.c.l.b16 %v350
        %v383 = vunpack.c.l.b16 %v351
        %v384 = vpack.c.b16 %v369, %v368
        %v385 = vpack.c.b16 %v371, %v370
        %v386 = vpack.c.b16 %v373, %v372
        %v387 = vpack.c.b16 %v375, %v374
        %v388 = vpack.c.b16 %v377, %v376
        %v389 = vpack.c.b16 %v379, %v378
        %v390 = vpack.c.b16 %v381, %v380
        %v391 = vpack.c.b16 %v383, %v382
        %400 = vmatprep.subr.bf16.mxu0 0
        %401 = vmatpush1.bf16.msra.mxu0 %v391
        %402 = vmatprep.subr.bf16.mxu0 0
        %403 = vmatpush1.bf16.msra.mxu0 %v390
        %404 = vmatprep.subr.bf16.mxu0 0
        %405 = vmatpush1.bf16.msra.mxu0 %v389
        %406 = vmatprep.subr.bf16.mxu0 0
        %407 = vmatpush1.bf16.msra.mxu0 %v388
        %408 = vmatprep.subr.bf16.mxu0 0
        %409 = vmatpush1.bf16.msra.mxu0 %v387
        %410 = vmatprep.subr.bf16.mxu0 0
        %411 = vmatpush1.bf16.msra.mxu0 %v386
        %412 = vmatprep.subr.bf16.mxu0 0
        %413 = vmatpush1.bf16.msra.mxu0 %v385
        %414 = vmatprep.subr.bf16.mxu0 0
        %415 = vmatpush1.bf16.msra.mxu0 %v384
        %416 = vmatprep.subr.bf16.mxu0 0
        %417 = vmatpush2.bf16.msra.mxu0 0
        %418 = vmatprep.subr.bf16.mxu0 0
        %419 = vmatpush2.bf16.msra.mxu0 0
        %420 = vmatprep.subr.bf16.mxu0 0
        %421 = vmatpush2.bf16.msra.mxu0 0
        %422 = vmatprep.subr.bf16.mxu0 0
        %423 = vmatpush2.bf16.msra.mxu0 0
        %424 = vmatprep.subr.bf16.mxu0 0
        %425 = vmatpush2.bf16.msra.mxu0 0
        %426 = vmatprep.subr.bf16.mxu0 0
        %427 = vmatpush2.bf16.msra.mxu0 0
        %428 = vmatprep.subr.bf16.mxu0 0
        %429 = vmatpush2.bf16.msra.mxu0 0
        %430 = vmatprep.subr.bf16.mxu0 0
        %431 = vmatpush2.bf16.msra.mxu0 0
        %432 = vmatprep.mubr.bf16.mxu0 0
        %433 = vmatmul.mubr.bf16.gmra.mxu0 %v334
        %v434 = vpop.f32.mrf.mxu0
        %v435 = vadd.f32 0.0, %v434
        %v436 = vpop.f32.mrf.mxu0
        %v437 = vpop.f32.mrf.mxu0
        %v438 = vpop.f32.mrf.mxu0
        %439 = vdwg.mxu0
        %v440 = vadd.f32 %v335, %v435
        %441 = vst [vmem:[%s274] sm:$0xff] %v440
        %s442 = sand.u32 %s158, 1
        %s443 = scalar_lea.sflag [#allocation5], %s442
        %s444 = sand.u32 %s158, 1
        %s445 = smul.addr %s444, 8
        %s446 = scalar_lea.vmem [#allocation8], %s445
        // Predicated region
        $region53: #{tpu_custom_call.1} parent=39 // pred_check
          %p447 = pneg %p168
        $region54: #{tpu_custom_call.1} parent=39 // pred_check_branch
          %449 = sbr.rel (%p447) target = $region56
        $region55: #{tpu_custom_call.1} parent=39 // pred_region
          %s451 = ssub.s32 128, 128
          %452 = vsyncadd %s443, %s451
          %s453 = smul.addr %s27, 128
          %s454 = scalar_lea.hbm %s5, %s453
          %s456 = sshll.u32 %s446, 4
          %s457 = int_to_ptr.vmem [resolvable:$true] %s456
          %459 = dma.vmem_to_hbm [thread:$0]  %s457, 128, %s454, %s443
        $region56: #{tpu_custom_call.1} parent=39 // pred_fallthru
          _
      $region40: #{tpu_custom_call.1} parent=5 // pred_fallthru
        _
      %p460 = scmp.le.s32.totalorder 2, %s18
      // Predicated region
      $region57: #{tpu_custom_call.1} parent=5 // pred_check
        %p461 = pneg %p460
      $region58: #{tpu_custom_call.1} parent=5 // pred_check_branch
        %463 = sbr.rel (%p461) target = $region60
      $region59: #{tpu_custom_call.1} parent=5 // pred_region
        %s464 = ssub.s32 %s18, 2
        // Predicated region
        $region61: #{tpu_custom_call.1} parent=59 // pred_check
          %p465 = pneg %p174
        $region62: #{tpu_custom_call.1} parent=59 // pred_check_branch
          %467 = sbr.rel (%p465) target = $region64
        $region63: #{tpu_custom_call.1} parent=59 // pred_region
          %s468 = sand.u32 %s159, 1
          %s469 = scalar_lea.sflag [#allocation5], %s468
          %s470 = sand.u32 %s159, 1
          %s471 = smul.addr %s470, 8
          %s472 = scalar_lea.vmem [#allocation8], %s471
          %473 = dma.done %s469, 128
        $region64: #{tpu_custom_call.1} parent=59 // pred_fallthru
          _
      $region60: #{tpu_custom_call.1} parent=5 // pred_fallthru
        _
    $region6: #{tpu_custom_call.1} parent=1 // loop_footer
      %s22 = sadd.s32 1, %s18
    $region7: #{tpu_custom_call.1} parent=1 // loop_footer_branch
      %17 = sbr.rel target = $region3
    $region8: #{tpu_custom_call.1} parent=1 // loop_exit
      _
    %474 = vsyncpa [#allocation4], 1
    %s475 = scalar_lea.sflag [#allocation4], 1
    %476 = vsyncpa %s475, 1
    %477 = vsyncpa [#allocation7], 1
    %478 = vsyncpa [#allocation5], 1
    %s479 = scalar_lea.sflag [#allocation5], 1
    %480 = vsyncpa %s479, 1

</llo_original>
